<compile_context>
chip_gen: v7x
topology: tpu7x:2x2x1
jax: 0.10.0
libtpu: 0.0.40
codegen_flags: <defaults>
</compile_context>

<pallas_src>
import jax
import jax.numpy as jnp
from jax.experimental import pallas as pl
from jax.experimental.pallas import tpu as pltpu

ALPHA = 0.25
GAMMA = 2.0

LANE_WIDTH = 1024      # lane-dense last dim (multiple of 128)
MAX_ROW_TILE = 1024    # (1024, 1024) f32 = 4 MiB per pipeline buffer


def _focal_loss_kernel(x_ref, t_ref, o_ref):
    # Upcast once; all math in f32 (v5e has no bf16 VPU/EUP).
    x = x_ref[...].astype(jnp.float32)
    t = t_ref[...].astype(jnp.float32)

    one_m_t = 1.0 - t
    one_m_x = 1.0 - x

    # F.binary_cross_entropy clamps log terms at -100 (PyTorch semantics).
    log_x = jnp.maximum(jnp.log(x), -100.0)
    log_1mx = jnp.maximum(jnp.log(one_m_x), -100.0)
    bce = -(t * log_x + one_m_t * log_1mx)

    # 1 - p_t = t*(1-x) + (1-t)*x  (reuses existing temporaries directly)
    one_m_pt = t * one_m_x + one_m_t * x
    # alpha_factor = t*a + (1-t)*(1-a) = (1-a) + t*(2a-1)
    alpha_factor = (1.0 - ALPHA) + t * (2.0 * ALPHA - 1.0)
    if GAMMA == 2.0:
        modulating_factor = one_m_pt * one_m_pt      # exact match for ** 2
    else:
        modulating_factor = jnp.power(one_m_pt, GAMMA)

    o_ref[...] = (bce * alpha_factor * modulating_factor).astype(o_ref.dtype)


def _focal_loss_elementwise_jnp(x, t):
    """Plain-jnp tail path (<LANE_WIDTH elements). Same math as the kernel."""
    x = x.astype(jnp.float32)
    t = t.astype(jnp.float32)
    bce = -(t * jnp.maximum(jnp.log(x), -100.0)
            + (1.0 - t) * jnp.maximum(jnp.log(1.0 - x), -100.0))
    one_m_pt = t * (1.0 - x) + (1.0 - t) * x
    alpha_factor = (1.0 - ALPHA) + t * (2.0 * ALPHA - 1.0)
    return bce * alpha_factor * (one_m_pt * one_m_pt)


def _choose_row_tile(rows):
    """Pick a sublane-aligned row tile; aim for >=2 grid steps (v7x 2 TCs)."""
    if rows <= 8:
        # Block equals the full (small) array row extent -> legal despite <8.
        return rows
    half = (rows + 1) // 2
    half_rounded = ((half + 7) // 8) * 8          # keep sublane (8) alignment
    return min(MAX_ROW_TILE, half_rounded)


def _run_focal_kernel_2d(x2, t2, out_dtype):
    rows, _ = x2.shape
    row_tile = _choose_row_tile(rows)
    grid = (pl.cdiv(rows, row_tile),)

    n = rows * LANE_WIDTH
    itemsize = jnp.dtype(x2.dtype).itemsize
    cost = pl.CostEstimate(
        flops=18 * n,
        transcendentals=2 * n,
        bytes_accessed=2 * n * itemsize + n * jnp.dtype(out_dtype).itemsize,
    )

    return pl.pallas_call(
        _focal_loss_kernel,
        out_shape=jax.ShapeDtypeStruct((rows, LANE_WIDTH), out_dtype),
        grid_spec=pltpu.PrefetchScalarGridSpec(
            num_scalar_prefetch=0,
            grid=grid,
            in_specs=[
                pl.BlockSpec((row_tile, LANE_WIDTH), lambda i: (i, 0)),
                pl.BlockSpec((row_tile, LANE_WIDTH), lambda i: (i, 0)),
            ],
            out_specs=pl.BlockSpec((row_tile, LANE_WIDTH), lambda i: (i, 0)),
        ),
        compiler_params=pltpu.CompilerParams(
            dimension_semantics=("parallel",),
            vmem_limit_bytes=32 * 1024 * 1024,
        ),
        cost_estimate=cost,
    )(x2, t2)


def focal_loss(inputs, targets, reduction="none"):
    assert inputs.shape == targets.shape
    orig_shape = inputs.shape
    orig_dtype = inputs.dtype

    total = 1
    for d in orig_shape:
        total *= d

    x_flat = inputs.reshape(-1)
    t_flat = targets.reshape(-1)

    main_rows = total // LANE_WIDTH
    main = main_rows * LANE_WIDTH
    tail = total - main

    pieces = []
    if main_rows > 0:
        if tail == 0:
            # Fast path: pure reshape of the contiguous tensor — no copies.
            x2 = x_flat.reshape(main_rows, LANE_WIDTH)
            t2 = t_flat.reshape(main_rows, LANE_WIDTH)
        else:
            x2 = x_flat[:main].reshape(main_rows, LANE_WIDTH)
            t2 = t_flat[:main].reshape(main_rows, LANE_WIDTH)
        out2 = _run_focal_kernel_2d(x2, t2, orig_dtype)
        pieces.append(out2.reshape(-1))
    if tail > 0:
        # <1024-element remainder: plain jnp (elementwise), avoids whole-array pad.
        tail_out = _focal_loss_elementwise_jnp(x_flat[main:], t_flat[main:])
        pieces.append(tail_out.astype(orig_dtype))

    loss_flat = pieces[0] if len(pieces) == 1 else jnp.concatenate(pieces)
    loss = loss_flat.reshape(orig_shape)

    if reduction == "mean":
        loss = loss.mean()
    elif reduction == "sum":
        loss = loss.sum()
    return loss


def _reference_focal_loss(inputs, targets):
    x = inputs.astype(jnp.float32)
    t = targets.astype(jnp.float32)
    bce = -(t * jnp.maximum(jnp.log(x), -100.0)
            + (1.0 - t) * jnp.maximum(jnp.log(1.0 - x), -100.0))
    p_t = t * x + (1.0 - t) * (1.0 - x)
    alpha_factor = t * ALPHA + (1.0 - t) * (1.0 - ALPHA)
    modulating_factor = (1.0 - p_t) ** GAMMA
    return (bce * alpha_factor * modulating_factor).astype(inputs.dtype)


if __name__ == "__main__":
    key = jax.random.PRNGKey(0)
    k1, k2, k3, k4, k5, k6 = jax.random.split(key, 6)

    # Case 1: NCHW probabilities + binary targets, total divisible by 1024
    # (fast path, no padding/copies).
    N, C, H, W = 2, 4, 16, 16
    inputs = jax.random.uniform(k1, (N, C, H, W), dtype=jnp.float32,
                                minval=1e-4, maxval=1.0 - 1e-4)
    targets = (jax.random.uniform(k2, (N, C, H, W)) > 0.5).astype(jnp.float32)
    out = jax.block_until_ready(focal_loss(inputs, targets, reduction="none"))
    ref = _reference_focal_loss(inputs, targets)
    assert out.shape == inputs.shape
    assert jnp.allclose(out, ref, atol=1e-5, rtol=1e-5)

    # Case 2: total NOT divisible by 1024 (prefix kernel + jnp tail path).
    inputs2 = jax.random.uniform(k3, (2, 3, 17, 19), dtype=jnp.float32,
                                 minval=1e-4, maxval=1.0 - 1e-4)
    targets2 = (jax.random.uniform(k4, (2, 3, 17, 19)) > 0.5).astype(jnp.float32)
    out2 = jax.block_until_ready(focal_loss(inputs2, targets2, reduction="none"))
    ref2 = _reference_focal_loss(inputs2, targets2)
    assert out2.shape == inputs2.shape
    assert jnp.allclose(out2, ref2, atol=1e-5, rtol=1e-5)

    # Case 3: rows not divisible by the row tile (ragged last block, grid >= 2).
    inputs3 = jax.random.uniform(k5, (2, 8, 40, 32), dtype=jnp.float32,
                                 minval=1e-4, maxval=1.0 - 1e-4)
    targets3 = (jax.random.uniform(k6, (2, 8, 40, 32)) > 0.5).astype(jnp.float32)
    out3 = jax.block_until_ready(focal_loss(inputs3, targets3, reduction="none"))
    ref3 = _reference_focal_loss(inputs3, targets3)
    assert out3.shape == inputs3.shape
    assert jnp.allclose(out3, ref3, atol=1e-5, rtol=1e-5)

    print("KERNEL_OK")
</pallas_src>

<mosaic_0001>
module attributes {stable_mosaic.version = 11 : i64} {
  func.func @_focal_loss_kernel(%arg0: i32, %arg1: memref<2x1024xf32, #tpu.memory_space<vmem>>, %arg2: memref<2x1024xf32, #tpu.memory_space<vmem>>, %arg3: memref<2x1024xf32, #tpu.memory_space<vmem>>) attributes {dimension_semantics = [#tpu.dimension_semantics<parallel>], iteration_bounds = array<i64: 1>, scalar_prefetch = 0 : i64, scratch_operands = 0 : i64, tpu.core_type = #tpu.core_type<tc>, window_params = [{transform_indices = @transform_0, window_bounds = array<i64: 2, 1024>}, {transform_indices = @transform_1, window_bounds = array<i64: 2, 1024>}, {transform_indices = @transform_2, window_bounds = array<i64: 2, 1024>}]} {
    %c0 = arith.constant 0 : index
    %c0_0 = arith.constant 0 : index
    %0 = vector.load %arg1[%c0, %c0_0] : memref<2x1024xf32, #tpu.memory_space<vmem>>, vector<2x1024xf32>
    %c0_1 = arith.constant 0 : index
    %c0_2 = arith.constant 0 : index
    %1 = vector.load %arg2[%c0_1, %c0_2] : memref<2x1024xf32, #tpu.memory_space<vmem>>, vector<2x1024xf32>
    %cst = arith.constant 1.000000e+00 : f32
    %2 = vector.broadcast %cst : f32 to vector<2x1024xf32>
    %3 = arith.subf %2, %1 : vector<2x1024xf32>
    %cst_3 = arith.constant 1.000000e+00 : f32
    %4 = vector.broadcast %cst_3 : f32 to vector<2x1024xf32>
    %5 = arith.subf %4, %0 : vector<2x1024xf32>
    %6 = math.log %0 : vector<2x1024xf32>
    %cst_4 = arith.constant -1.000000e+02 : f32
    %7 = vector.broadcast %cst_4 : f32 to vector<2x1024xf32>
    %8 = arith.maximumf %6, %7 : vector<2x1024xf32>
    %9 = math.log %5 : vector<2x1024xf32>
    %cst_5 = arith.constant -1.000000e+02 : f32
    %10 = vector.broadcast %cst_5 : f32 to vector<2x1024xf32>
    %11 = arith.maximumf %9, %10 : vector<2x1024xf32>
    %12 = arith.mulf %1, %8 : vector<2x1024xf32>
    %13 = arith.mulf %3, %11 : vector<2x1024xf32>
    %14 = arith.addf %12, %13 : vector<2x1024xf32>
    %cst_6 = arith.constant 0.000000e+00 : f32
    %15 = vector.broadcast %cst_6 : f32 to vector<2x1024xf32>
    %16 = arith.subf %15, %14 : vector<2x1024xf32>
    %17 = arith.mulf %1, %5 : vector<2x1024xf32>
    %18 = arith.mulf %3, %0 : vector<2x1024xf32>
    %19 = arith.addf %17, %18 : vector<2x1024xf32>
    %cst_7 = arith.constant -5.000000e-01 : f32
    %20 = vector.broadcast %cst_7 : f32 to vector<2x1024xf32>
    %21 = arith.mulf %1, %20 : vector<2x1024xf32>
    %cst_8 = arith.constant 7.500000e-01 : f32
    %22 = vector.broadcast %cst_8 : f32 to vector<2x1024xf32>
    %23 = arith.addf %22, %21 : vector<2x1024xf32>
    %24 = arith.mulf %19, %19 : vector<2x1024xf32>
    %25 = arith.mulf %16, %23 : vector<2x1024xf32>
    %26 = arith.mulf %25, %24 : vector<2x1024xf32>
    %c0_9 = arith.constant 0 : index
    %c0_10 = arith.constant 0 : index
    %27 = vector.load %arg3[%c0_9, %c0_10] : memref<2x1024xf32, #tpu.memory_space<vmem>>, vector<2x1024xf32>
    tpu.vector_store %arg3[%c0_9, %c0_10], %26 {strides = array<i32>} : memref<2x1024xf32, #tpu.memory_space<vmem>>, vector<2x1024xf32>,
    return
  }
  func.func @transform_0(%arg0: i32) -> (i32, i32) {
    %c0_i32 = arith.constant 0 : i32
    %c0_i32_0 = arith.constant 0 : i32
    return %arg0, %c0_i32 : i32, i32
  }
  func.func @transform_1(%arg0: i32) -> (i32, i32) {
    %c0_i32 = arith.constant 0 : i32
    %c0_i32_0 = arith.constant 0 : i32
    return %arg0, %c0_i32 : i32, i32
  }
  func.func @transform_2(%arg0: i32) -> (i32, i32) {
    %c0_i32 = arith.constant 0 : i32
    %c0_i32_0 = arith.constant 0 : i32
    return %arg0, %c0_i32 : i32, i32
  }
}

</mosaic_0001>

<llo_original>
// kernel: tpu_custom_call.1
$region0: #{tpu_custom_call.1}
  #allocation0 [shape = 'u32[]', space=smem, size = 0x4, offset = 0x4, fixed_abs, tag = 'smem constant byte address 0x4 - core index']
  #allocation1 [shape = 'u32[144,128]{1,0:T(1,128)}', space=vmem, size = 0x12000, scoped, tag = 'internal scratch']
  %s0 = inlined_call_operand.hbm [shape: f32[2,1024], index: 0, kind: input, shape index: {}]
  %s1 = inlined_call_operand.hbm [shape: f32[2,1024], index: 1, kind: input, shape index: {}]
  %s2 = inlined_call_operand.hbm [shape: f32[2,1024], index: 2, kind: output, shape index: {}]
  %s3 = sld [smem:[#allocation0]]
  $region26: #{tpu_custom_call.1} parent=0
    _
  %s5 = ssub.s32 1, %s3
  %s6 = scalar_select 0, %s5, %s3
  $region1: #{tpu_custom_call.1} parent=0
    #allocation2 [shape = 'u8[8192]{0}', space=vmem, size = 0x2000, scoped, tag = 'input window, operand 0, single buffered']
    #allocation3 [shape = 's32[1]{0}', space=sflag, size = 0x4, scoped, tag = 'scoped memory for tpu_custom_call.1']
    #allocation4 [shape = 's32[1]{0}', space=sflag, size = 0x4, scoped, tag = 'scoped memory for tpu_custom_call.1']
    #allocation5 [shape = 'u8[8192]{0}', space=vmem, size = 0x2000, scoped, tag = 'input window, operand 1, single buffered']
    #allocation6 [shape = 's32[1]{0}', space=sflag, size = 0x4, scoped, tag = 'scoped memory for tpu_custom_call.1']
    #allocation7 [shape = 'u8[8192]{0}', space=vmem, size = 0x2000, scoped, tag = 'output window, operand 0, single buffered']
    %7 = vsyncpa [#allocation3], 0
    %8 = vsyncpa [#allocation6], 0
    %9 = vsyncpa [#allocation4], 0
    // Predicated region
    $region2: #{tpu_custom_call.1} parent=1 // pred_check
      _
    $region3: #{tpu_custom_call.1} parent=1 // pred_check_branch
      %11 = sbr.rel (0) target = $region5
    $region4: #{tpu_custom_call.1} parent=1 // pred_region
      %s13 = ssub.s32 256, 256
      %14 = vsyncadd [#allocation3], %s13
      %s16 = sshll.u32 [#allocation2], 4
      %s17 = int_to_ptr.vmem [resolvable:$true] %s16
      %19 = dma.hbm_to_vmem [thread:$0]  %s0, 256, %s17, [#allocation3]
    $region5: #{tpu_custom_call.1} parent=1 // pred_fallthru
      _
    // Predicated region
    $region6: #{tpu_custom_call.1} parent=1 // pred_check
      _
    $region7: #{tpu_custom_call.1} parent=1 // pred_check_branch
      %21 = sbr.rel (0) target = $region9
    $region8: #{tpu_custom_call.1} parent=1 // pred_region
      %s23 = ssub.s32 256, 256
      %24 = vsyncadd [#allocation6], %s23
      %s26 = sshll.u32 [#allocation5], 4
      %s27 = int_to_ptr.vmem [resolvable:$true] %s26
      %29 = dma.hbm_to_vmem [thread:$0]  %s1, 256, %s27, [#allocation6]
    $region9: #{tpu_custom_call.1} parent=1 // pred_fallthru
      _
    // Predicated region
    $region10: #{tpu_custom_call.1} parent=1 // pred_check
      _
    $region11: #{tpu_custom_call.1} parent=1 // pred_check_branch
      %31 = sbr.rel (0) target = $region13
    $region12: #{tpu_custom_call.1} parent=1 // pred_region
      %32 = dma.done [#allocation3], 256
    $region13: #{tpu_custom_call.1} parent=1 // pred_fallthru
      _
    // Predicated region
    $region14: #{tpu_custom_call.1} parent=1 // pred_check
      _
    $region15: #{tpu_custom_call.1} parent=1 // pred_check_branch
      %34 = sbr.rel (0) target = $region17
    $region16: #{tpu_custom_call.1} parent=1 // pred_region
      %35 = dma.done [#allocation6], 256
    $region17: #{tpu_custom_call.1} parent=1 // pred_fallthru
      _
    %v36 = vld [vmem:[#allocation2] sm:$0xff]
    %v37 = vld [vmem:[#allocation2 + $0x8] sm:$0xff]
    %v38 = vld [vmem:[#allocation5] sm:$0xff]
    %v39 = vld [vmem:[#allocation5 + $0x8] sm:$0xff]
    %v40 = vsub.f32 1.0, %v38
    %v41 = vsub.f32 1.0, %v39
    %v42 = vsub.f32 1.0, %v36
    %v43 = vsub.f32 1.0, %v37
    %v44 = vlog2.pop %v36
    %v45 = vmul.f32 %v44, 0.6931472
    %v46 = vlog2.pop %v37
    %v47 = vmul.f32 %v46, 0.6931472
    %v48 = vmax.f32 %v45, -100.0
    %v49 = vmax.f32 %v47, -100.0
    %v50 = vlog2.pop %v42
    %v51 = vmul.f32 %v50, 0.6931472
    %v52 = vlog2.pop %v43
    %v53 = vmul.f32 %v52, 0.6931472
    %v54 = vmax.f32 %v51, -100.0
    %v55 = vmax.f32 %v53, -100.0
    %v56 = vmul.f32 %v38, %v48
    %v57 = vmul.f32 %v39, %v49
    %v58 = vmul.f32 %v40, %v54
    %v59 = vmul.f32 %v41, %v55
    %v60 = vadd.f32 %v56, %v58
    %v61 = vadd.f32 %v57, %v59
    %v62 = vsub.f32 0.0, %v60
    %v63 = vsub.f32 0.0, %v61
    %v64 = vmul.f32 %v38, %v42
    %v65 = vmul.f32 %v39, %v43
    %v66 = vmul.f32 %v40, %v36
    %v67 = vmul.f32 %v41, %v37
    %v68 = vadd.f32 %v64, %v66
    %v69 = vadd.f32 %v65, %v67
    %v70 = vmul.f32 %v38, -0.5
    %v71 = vmul.f32 %v39, -0.5
    %v72 = vadd.f32 %v70, 0.75
    %v73 = vadd.f32 %v71, 0.75
    %v74 = vmul.f32 %v68, %v68
    %v75 = vmul.f32 %v69, %v69
    %v76 = vmul.f32 %v62, %v72
    %v77 = vmul.f32 %v63, %v73
    %v78 = vmul.f32 %v76, %v74
    %v79 = vmul.f32 %v77, %v75
    %80 = vst [vmem:[#allocation7] sm:$0xff] %v78
    %81 = vst [vmem:[#allocation7 + $0x8] sm:$0xff] %v79
    // Predicated region
    $region18: #{tpu_custom_call.1} parent=1 // pred_check
      _
    $region19: #{tpu_custom_call.1} parent=1 // pred_check_branch
      %83 = sbr.rel (0) target = $region21
    $region20: #{tpu_custom_call.1} parent=1 // pred_region
      %s85 = ssub.s32 256, 256
      %86 = vsyncadd [#allocation4], %s85
      %s88 = sshll.u32 [#allocation7], 4
      %s89 = int_to_ptr.vmem [resolvable:$true] %s88
      %91 = dma.vmem_to_hbm [thread:$0]  %s89, 256, %s2, [#allocation4]
    $region21: #{tpu_custom_call.1} parent=1 // pred_fallthru
      _
    // Predicated region
    $region22: #{tpu_custom_call.1} parent=1 // pred_check
      _
    $region23: #{tpu_custom_call.1} parent=1 // pred_check_branch
      %93 = sbr.rel (0) target = $region25
    $region24: #{tpu_custom_call.1} parent=1 // pred_region
      %94 = dma.done [#allocation4], 256
    $region25: #{tpu_custom_call.1} parent=1 // pred_fallthru
      _
    %95 = vsyncpa [#allocation3], 1
    %96 = vsyncpa [#allocation6], 1
    %97 = vsyncpa [#allocation4], 1

</llo_original>
